<compile_context>
chip_gen: v7x
topology: tpu7x:2x2x1
jax: 0.10.0
libtpu: 0.0.40
codegen_flags: <defaults>
</compile_context>

<pallas_src>
import functools

import jax
import jax.numpy as jnp
from jax import lax
from jax.experimental import pallas as pl
from jax.experimental.pallas import tpu as pltpu


def _cumul_loss_kernel(tri_ref, o_ref, l_ref, part_ref, *, bb, n_chunks, tc, d):
    tri = tri_ref[...]  # (tc, tc) f32, resident across the whole grid (constant index_map)

    def batch_body(b, acc):
        # linearity trick: cumsum(o) - cumsum(l) == cumsum(o - l)
        carry = jnp.zeros((1, d), jnp.float32)
        for c in range(n_chunks):  # static unroll over T chunks
            lo = c * tc
            # per-chunk diff: never materialize the full (T, D) f32 difference
            chunk = (o_ref[b, lo:lo + tc, :].astype(jnp.float32)
                     - l_ref[b, lo:lo + tc, :].astype(jnp.float32))      # (tc, d)
            # cumsum along T inside the chunk via one MXU matmul + running carry.
            cum = jnp.dot(tri, chunk, preferred_element_type=jnp.float32) + carry
            # sublane-only reduce per chunk; cross-lane reduce deferred to the end.
            acc = acc + jnp.sum(jnp.abs(cum), axis=0, keepdims=True)
            if c + 1 < n_chunks:
                carry = cum[tc - 1:tc, :]  # last row == carry + sum(chunk, axis=0)
        return acc

    acc = lax.fori_loop(0, bb, batch_body,
                        jnp.zeros((1, d), jnp.float32), unroll=True)

    partial = jnp.sum(acc)  # the single cross-lane reduce of this grid step
    # Splat the scalar partial across this step's own lane-dense (1, 8, 128) output
    # block; the wrapper reads [:, 0, 0] and does the final reduction + mean.
    part_ref[...] = jnp.broadcast_to(partial, part_ref.shape).astype(jnp.float32)


def _mxu_native_dim():
    """128 on v5e/v4-class MXUs, 256 on v6e/v7x."""
    try:
        kind = jax.devices()[0].device_kind.lower()
    except Exception:
        return 256
    if "v5 lite" in kind or "v5e" in kind or "v5litepod" in kind or "v4" in kind:
        return 128
    return 256


def _pick_vmem_limit():
    """Generation-aware VMEM limit (bytes), safe fallback if introspection fails."""
    fallback = 48 * 1024 * 1024  # safe on v5e/v6e (128 MiB) and v7x (64 MiB)
    try:
        info = pltpu.get_tpu_info()
        phys = getattr(info, "vmem_capacity_bytes", None)
        if phys:
            return int(min(int(phys * 0.7), 112 * 1024 * 1024))
    except Exception:
        pass
    return fallback


def _pick_t_chunk(t, native):
    """Chunk T with an MXU-native tile so FLOPs are O(T*tc*D) and tri stays small."""
    if t <= native:
        return t
    candidates = (native, 128, 64, 32, 16, 8) if native != 128 else (128, 64, 32, 16, 8)
    for tc in candidates:
        if t % tc == 0:
            return tc
    # TODO(synk): pad T to a multiple of `native` and mask the tail chunk instead of
    # falling back to a full-T tri when T has no aligned divisor.
    return t


def _pick_batch_tile(b, t, d, itemsize, tc, vmem_limit, max_unroll=8):
    """Largest divisor of B fitting the VMEM budget, keeping >= 2 grid steps."""
    # two inputs x double-buffered pipeline, in the input dtype
    per_batch = 2 * 2 * t * d * itemsize
    # resident tri (double-buffered) + in-kernel f32 temporaries (chunk/cum/|cum|) + slack
    fixed = 2 * tc * tc * 4 + 6 * tc * d * 4 + (1 << 20)
    budget = max(vmem_limit - fixed, per_batch)
    bb_cap = max(1, min(max_unroll, budget // max(per_batch, 1)))
    if b >= 2:
        bb_cap = min(bb_cap, b // 2)  # guarantee >= 2 parallel grid steps (v7x 2-TC)
    for cand in range(min(b, int(bb_cap)), 0, -1):
        if b % cand == 0:
            return cand
    return 1


def cumul_loss(outputs, labels):
    """Pallas equivalent of CumulLoss(reduction='mean')(outputs, labels)."""
    assert outputs.shape == labels.shape
    B, T, D = outputs.shape
    total = B * T * D
    itemsize = max(jnp.dtype(outputs.dtype).itemsize, jnp.dtype(labels.dtype).itemsize)

    native = _mxu_native_dim()
    tc = _pick_t_chunk(T, native)
    n_chunks = T // tc

    vmem_limit = _pick_vmem_limit()
    bb = _pick_batch_tile(B, T, D, itemsize, tc, vmem_limit)
    num_steps = B // bb

    # Lower-triangular ones matrix, built ONCE and kept resident (constant index_map).
    tri = jnp.tril(jnp.ones((tc, tc), dtype=jnp.float32))

    kernel = functools.partial(_cumul_loss_kernel, bb=bb, n_chunks=n_chunks, tc=tc, d=D)

    cost = pl.CostEstimate(
        flops=2 * B * T * tc * D,
        transcendentals=0,
        bytes_accessed=(outputs.size + labels.size) * itemsize + num_steps * 8 * 128 * 4,
    )

    partials = pl.pallas_call(
        kernel,
        out_shape=jax.ShapeDtypeStruct((num_steps, 8, 128), jnp.float32),
        grid_spec=pltpu.PrefetchScalarGridSpec(
            num_scalar_prefetch=0,
            grid=(num_steps,),
            in_specs=[
                pl.BlockSpec((tc, tc), lambda i: (0, 0)),        # resident tri
                pl.BlockSpec((bb, T, D), lambda i: (i, 0, 0)),   # outputs tile
                pl.BlockSpec((bb, T, D), lambda i: (i, 0, 0)),   # labels tile
            ],
            out_specs=pl.BlockSpec((1, 8, 128), lambda i: (i, 0, 0)),
        ),
        compiler_params=pltpu.CompilerParams(
            # No carried state across the grid -> safe to shard across TensorCores.
            dimension_semantics=("parallel",),
            vmem_limit_bytes=int(vmem_limit),
        ),
        cost_estimate=cost,
    )(tri, outputs, labels)

    # reduction='mean' (tree-reduce of per-step partials in the wrapper)
    return jnp.sum(partials[:, 0, 0]) * jnp.float32(1.0 / total)


if __name__ == "__main__":
    key = jax.random.PRNGKey(0)
    k1, k2 = jax.random.split(key)
    B, T, D = 2, 8, 32
    outputs = jax.random.normal(k1, (B, T, D), dtype=jnp.float32)
    labels = jax.random.normal(k2, (B, T, D), dtype=jnp.float32)

    loss = jax.block_until_ready(cumul_loss(outputs, labels))

    # pure-JAX reference
    ref = jnp.mean(
        jnp.abs(jnp.cumsum(outputs, axis=1) - jnp.cumsum(labels, axis=1))
    )

    assert jnp.allclose(loss, ref, rtol=1e-5, atol=1e-5), (loss, ref)
    print("KERNEL_OK")
</pallas_src>

<mosaic_0001>
module attributes {stable_mosaic.version = 11 : i64} {
  func.func @_cumul_loss_kernel(%arg0: i32, %arg1: memref<8x8xf32, #tpu.memory_space<vmem>>, %arg2: memref<1x8x32xf32, #tpu.memory_space<vmem>>, %arg3: memref<1x8x32xf32, #tpu.memory_space<vmem>>, %arg4: memref<1x8x128xf32, #tpu.memory_space<vmem>>) attributes {dimension_semantics = [#tpu.dimension_semantics<parallel>], iteration_bounds = array<i64: 2>, scalar_prefetch = 0 : i64, scratch_operands = 0 : i64, tpu.core_type = #tpu.core_type<tc>, window_params = [{pipeline_mode = #tpu.pipeline_mode<synchronous>, transform_indices = @transform_0, window_bounds = array<i64: 8, 8>}, {transform_indices = @transform_1, window_bounds = array<i64: 1, 8, 32>}, {transform_indices = @transform_2, window_bounds = array<i64: 1, 8, 32>}, {transform_indices = @transform_3, window_bounds = array<i64: 1, 8, 128>}]} {
    %c0 = arith.constant 0 : index
    %c0_0 = arith.constant 0 : index
    %0 = vector.load %arg1[%c0, %c0_0] : memref<8x8xf32, #tpu.memory_space<vmem>>, vector<8x8xf32>
    %cst = arith.constant 0.000000e+00 : f32
    %1 = vector.broadcast %cst : f32 to vector<1x32xf32>
    %c0_i32 = arith.constant 0 : i32
    %cst_1 = arith.constant 0.000000e+00 : f32
    %2 = vector.broadcast %cst_1 : f32 to vector<1x32xf32>
    %3 = arith.index_cast %c0_i32 : i32 to index
    %c0_2 = arith.constant 0 : index
    %c0_3 = arith.constant 0 : index
    %4 = vector.load %arg2[%3, %c0_2, %c0_3] : memref<1x8x32xf32, #tpu.memory_space<vmem>>, vector<1x8x32xf32>
    %5 = vector.shape_cast %4 : vector<1x8x32xf32> to vector<8x32xf32>
    %6 = arith.index_cast %c0_i32 : i32 to index
    %c0_4 = arith.constant 0 : index
    %c0_5 = arith.constant 0 : index
    %7 = vector.load %arg3[%6, %c0_4, %c0_5] : memref<1x8x32xf32, #tpu.memory_space<vmem>>, vector<1x8x32xf32>
    %8 = vector.shape_cast %7 : vector<1x8x32xf32> to vector<8x32xf32>
    %9 = arith.subf %5, %8 : vector<8x32xf32>
    %cst_6 = arith.constant dense<0.000000e+00> : vector<8x32xf32>
    %10 = tpu.matmul %0, %9, %cst_6 {dimension_numbers = #tpu.dot_dimension_numbers<[1], [0], [0], [1], [0, 0, 1, 1], [], []>} : vector<8x8xf32>, vector<8x32xf32>, vector<8x32xf32> -> vector<8x32xf32>
    %11 = vector.broadcast %2 : vector<1x32xf32> to vector<8x32xf32>
    %12 = arith.addf %10, %11 : vector<8x32xf32>
    %13 = math.absf %12 : vector<8x32xf32>
    %cst_7 = arith.constant dense<0.000000e+00> : vector<32xf32>
    %14 = vector.multi_reduction <add>, %13, %cst_7 [0] : vector<8x32xf32> to vector<32xf32>
    %15 = vector.shape_cast %14 : vector<32xf32> to vector<1x32xf32>
    %16 = arith.addf %1, %15 : vector<1x32xf32>
    %c1_i32 = arith.constant 1 : i32
    %17 = vector.shape_cast %16 : vector<1x32xf32> to vector<1x1x32xf32>
    %cst_8 = arith.constant dense<0.000000e+00> : vector<1xf32>
    %18 = vector.multi_reduction <add>, %17, %cst_8 [1, 2] : vector<1x1x32xf32> to vector<1xf32>
    %19 = vector.shape_cast %18 : vector<1xf32> to vector<1x1x1xf32>
    %20 = vector.extract %19[0, 0, 0] : f32 from vector<1x1x1xf32>
    %21 = vector.broadcast %20 : f32 to vector<1x8x128xf32>
    %c0_9 = arith.constant 0 : index
    %c0_10 = arith.constant 0 : index
    %c0_11 = arith.constant 0 : index
    %22 = vector.load %arg4[%c0_9, %c0_10, %c0_11] : memref<1x8x128xf32, #tpu.memory_space<vmem>>, vector<1x8x128xf32>
    tpu.vector_store %arg4[%c0_9, %c0_10, %c0_11], %21 {strides = array<i32>} : memref<1x8x128xf32, #tpu.memory_space<vmem>>, vector<1x8x128xf32>,
    return
  }
  func.func @transform_0(%arg0: i32) -> (i32, i32) {
    %c0_i32 = arith.constant 0 : i32
    %c0_i32_0 = arith.constant 0 : i32
    %c0_i32_1 = arith.constant 0 : i32
    return %c0_i32, %c0_i32_0 : i32, i32
  }
  func.func @transform_1(%arg0: i32) -> (i32, i32, i32) {
    %c0_i32 = arith.constant 0 : i32
    %c0_i32_0 = arith.constant 0 : i32
    %c0_i32_1 = arith.constant 0 : i32
    return %arg0, %c0_i32, %c0_i32_0 : i32, i32, i32
  }
  func.func @transform_2(%arg0: i32) -> (i32, i32, i32) {
    %c0_i32 = arith.constant 0 : i32
    %c0_i32_0 = arith.constant 0 : i32
    %c0_i32_1 = arith.constant 0 : i32
    return %arg0, %c0_i32, %c0_i32_0 : i32, i32, i32
  }
  func.func @transform_3(%arg0: i32) -> (i32, i32, i32) {
    %c0_i32 = arith.constant 0 : i32
    %c0_i32_0 = arith.constant 0 : i32
    %c0_i32_1 = arith.constant 0 : i32
    return %arg0, %c0_i32, %c0_i32_0 : i32, i32, i32
  }
}

</mosaic_0001>

<llo_original>
// kernel: tpu_custom_call.1
$region0: #{tpu_custom_call.1}
  #allocation0 [shape = 'u32[]', space=smem, size = 0x4, offset = 0x4, fixed_abs, tag = 'smem constant byte address 0x4 - core index']
  #allocation1 [shape = 'u32[144,128]{1,0:T(1,128)}', space=vmem, size = 0x12000, scoped, tag = 'internal scratch']
  %s0 = inlined_call_operand.hbm [shape: f32[8,8], index: 0, kind: input, shape index: {}]
  %s1 = inlined_call_operand.hbm [shape: f32[2,8,32], index: 1, kind: input, shape index: {}]
  %s2 = inlined_call_operand.hbm [shape: f32[2,8,32], index: 2, kind: input, shape index: {}]
  %s3 = inlined_call_operand.hbm [shape: f32[2,8,128], index: 3, kind: output, shape index: {}]
  %s4 = sld [smem:[#allocation0]]
  $region57: #{tpu_custom_call.1} parent=0
    _
  %s6 = ssub.s32 1, %s4
  %s7 = scalar_select 0, %s6, %s4
  $region1: #{tpu_custom_call.1} parent=0
    #allocation2 [shape = 'u8[4096]{0}', space=vmem, size = 0x1000, scoped, tag = 'input window, operand 0, single buffered']
    #allocation3 [shape = 's32[2]{0}', space=sflag, size = 0x8, scoped, tag = 'scoped memory for tpu_custom_call.1']
    #allocation4 [shape = 's32[2]{0}', space=sflag, size = 0x8, scoped, tag = 'scoped memory for tpu_custom_call.1']
    #allocation5 [shape = 'u8[8192]{0}', space=vmem, size = 0x2000, scoped, tag = 'input window, operand 1']
    #allocation6 [shape = 's32[2]{0}', space=sflag, size = 0x8, scoped, tag = 'scoped memory for tpu_custom_call.1']
    #allocation7 [shape = 'u8[8192]{0}', space=vmem, size = 0x2000, scoped, tag = 'input window, operand 2']
    #allocation8 [shape = 'u8[8192]{0}', space=vmem, size = 0x2000, scoped, tag = 'output window, operand 0']
    %8 = vsyncpa [#allocation3], 0
    %9 = vsyncpa [#allocation6], 0
    %s10 = scalar_lea.sflag [#allocation6], 1
    %11 = vsyncpa %s10, 0
    %12 = vsyncpa [#allocation4], 0
    %s13 = scalar_lea.sflag [#allocation4], 1
    %14 = vsyncpa %s13, 0
    loop: start=0, step=1, limit=4
    $region2: #{tpu_custom_call.1} parent=1 // loop_pre_header
      _
    $region3: #{tpu_custom_call.1} parent=1 // loop_header
      %s16 = sphi 0, %s20
      %p17 = scmp.ge.s32.totalorder %s16, 4
      %s24 = sphi 0, %s24
      %s26 = sphi 0, %s24
      %s27 = sphi 0, %s26
      %s41 = sphi 0, %s27
      %s47 = sphi 0, %s49
      %s50 = sphi 0, %s47
      %s51 = sphi 0, %s50
      %s67 = sphi 0, %s51
      %s73 = sphi 0, %s75
      %s76 = sphi 0, %s73
      %s77 = sphi 0, %s76
      %s93 = sphi 0, %s77
      %s99 = sphi 0, %s101
      %s102 = sphi 0, %s99
      %s103 = sphi 0, %s102
      %s119 = sphi 0, %s103
    $region4: #{tpu_custom_call.1} parent=1 // loop_header_branch
      %19 = sbr.rel (%p17) target = $region8
    $region5: #{tpu_custom_call.1} parent=1 // loop_body
      %s21 = ssub.s32 %s16, 1
      %s22 = ssub.s32 %s16, 2
      %s23 = sadd.s32 %s16, 1
      %s25 = sadd.s32 %s24, 1
      %p28 = scmp.eq.s32.totalorder %s16, 1
      %p29 = scmp.ne.s32.totalorder %s24, %s26
      %p30 = scmp.eq.s32.totalorder %s16, 0
      %p31 = por %p29, %p30
      %p32 = scmp.ne.s32.totalorder %s24, %s26
      %p33 = scmp.eq.s32.totalorder %s21, 1
      %p34 = por %p32, %p33
      %p35 = scmp.ne.s32.totalorder %s26, %s27
      %p36 = scmp.eq.s32.totalorder %s21, 0
      %p37 = por %p35, %p36
      %p38 = scmp.ne.s32.totalorder %s26, %s27
      %p39 = scmp.eq.s32.totalorder %s22, 1
      %p40 = por %p38, %p39
      %p42 = scmp.ne.s32.totalorder %s27, %s41
      %p43 = scmp.eq.s32.totalorder %s22, 0
      %p44 = por %p42, %p43
      %s45 = ssub.s32 %s16, %s23
      %p46 = scmp.eq.s32.totalorder %s45, 0
      %s48 = sadd.s32 %s47, 1
      %s49 = scalar_select %p46, %s47, %s48
      %p52 = pneg %p46
      %p53 = scmp.eq.s32.totalorder %s16, 1
      %p54 = por %p52, %p53
      %p55 = scmp.ne.s32.totalorder %s47, %s50
      %p56 = scmp.eq.s32.totalorder %s16, 0
      %p57 = por %p55, %p56
      %p58 = scmp.ne.s32.totalorder %s47, %s50
      %p59 = scmp.eq.s32.totalorder %s21, 1
      %p60 = por %p58, %p59
      %p61 = scmp.ne.s32.totalorder %s50, %s51
      %p62 = scmp.eq.s32.totalorder %s21, 0
      %p63 = por %p61, %p62
      %p64 = scmp.ne.s32.totalorder %s50, %s51
      %p65 = scmp.eq.s32.totalorder %s22, 1
      %p66 = por %p64, %p65
      %p68 = scmp.ne.s32.totalorder %s51, %s67
      %p69 = scmp.eq.s32.totalorder %s22, 0
      %p70 = por %p68, %p69
      %s71 = ssub.s32 %s16, %s23
      %p72 = scmp.eq.s32.totalorder %s71, 0
      %s74 = sadd.s32 %s73, 1
      %s75 = scalar_select %p72, %s73, %s74
      %p78 = pneg %p72
      %p79 = scmp.eq.s32.totalorder %s16, 1
      %p80 = por %p78, %p79
      %p81 = scmp.ne.s32.totalorder %s73, %s76
      %p82 = scmp.eq.s32.totalorder %s16, 0
      %p83 = por %p81, %p82
      %p84 = scmp.ne.s32.totalorder %s73, %s76
      %p85 = scmp.eq.s32.totalorder %s21, 1
      %p86 = por %p84, %p85
      %p87 = scmp.ne.s32.totalorder %s76, %s77
      %p88 = scmp.eq.s32.totalorder %s21, 0
      %p89 = por %p87, %p88
      %p90 = scmp.ne.s32.totalorder %s76, %s77
      %p91 = scmp.eq.s32.totalorder %s22, 1
      %p92 = por %p90, %p91
      %p94 = scmp.ne.s32.totalorder %s77, %s93
      %p95 = scmp.eq.s32.totalorder %s22, 0
      %p96 = por %p94, %p95
      %s97 = ssub.s32 %s16, %s23
      %p98 = scmp.eq.s32.totalorder %s97, 0
      %s100 = sadd.s32 %s99, 1
      %s101 = scalar_select %p98, %s99, %s100
      %p104 = pneg %p98
      %p105 = scmp.eq.s32.totalorder %s16, 1
      %p106 = por %p104, %p105
      %p107 = scmp.ne.s32.totalorder %s99, %s102
      %p108 = scmp.eq.s32.totalorder %s16, 0
      %p109 = por %p107, %p108
      %p110 = scmp.ne.s32.totalorder %s99, %s102
      %p111 = scmp.eq.s32.totalorder %s21, 1
      %p112 = por %p110, %p111
      %p113 = scmp.ne.s32.totalorder %s102, %s103
      %p114 = scmp.eq.s32.totalorder %s21, 0
      %p115 = por %p113, %p114
      %p116 = scmp.ne.s32.totalorder %s102, %s103
      %p117 = scmp.eq.s32.totalorder %s22, 1
      %p118 = por %p116, %p117
      %p120 = scmp.ne.s32.totalorder %s103, %s119
      %p121 = scmp.eq.s32.totalorder %s22, 0
      %p122 = por %p120, %p121
      %p123 = scmp.le.s32.totalorder 1, %s16
      %p124 = scmp.lt.s32.totalorder %s16, 3
      %p125 = pnand %p123, %p124
      %p126 = pneg %p125
      // Predicated region
      $region9: #{tpu_custom_call.1} parent=5 // pred_check
        _
      $region10: #{tpu_custom_call.1} parent=5 // pred_check_branch
        %128 = sbr.rel (%p125) target = $region12
      $region11: #{tpu_custom_call.1} parent=5 // pred_region
        %s129 = ssub.s32 %s16, 1
        // Predicated region
        $region13: #{tpu_custom_call.1} parent=11 // pred_check
          %p130 = pneg %p37
        $region14: #{tpu_custom_call.1} parent=11 // pred_check_branch
          %132 = sbr.rel (%p130) target = $region16
        $region15: #{tpu_custom_call.1} parent=11 // pred_region
          %s134 = ssub.s32 128, 128
          %135 = vsyncadd [#allocation3], %s134
          %s137 = sshll.u32 [#allocation2], 4
          %s138 = int_to_ptr.vmem [resolvable:$true] %s137
          %140 = dma.hbm_to_vmem [thread:$0]  %s0, 128, %s138, [#allocation3]
        $region16: #{tpu_custom_call.1} parent=11 // pred_fallthru
          _
      $region12: #{tpu_custom_call.1} parent=5 // pred_fallthru
        _
      %p141 = scmp.lt.s32.totalorder %s16, 2
      // Predicated region
      $region17: #{tpu_custom_call.1} parent=5 // pred_check
        %p142 = pneg %p141
      $region18: #{tpu_custom_call.1} parent=5 // pred_check_branch
        %144 = sbr.rel (%p142) target = $region20
      $region19: #{tpu_custom_call.1} parent=5 // pred_region
        // Predicated region
        $region21: #{tpu_custom_call.1} parent=19 // pred_check
          %p145 = pneg %p57
        $region22: #{tpu_custom_call.1} parent=19 // pred_check_branch
          %147 = sbr.rel (%p145) target = $region24
        $region23: #{tpu_custom_call.1} parent=19 // pred_region
          %s148 = sand.u32 %s16, 1
          %s149 = scalar_lea.sflag [#allocation6], %s148
          %s150 = sand.u32 %s47, 1
          %s151 = smul.addr %s150, 8
          %s152 = scalar_lea.vmem [#allocation5], %s151
          %s154 = ssub.s32 128, 128
          %155 = vsyncadd %s149, %s154
          %s156 = smul.addr %s16, 128
          %s157 = scalar_lea.hbm %s1, %s156
          %s159 = sshll.u32 %s152, 4
          %s160 = int_to_ptr.vmem [resolvable:$true] %s159
          %162 = dma.hbm_to_vmem [thread:$0]  %s157, 128, %s160, %s149
        $region24: #{tpu_custom_call.1} parent=19 // pred_fallthru
          _
        // Predicated region
        $region25: #{tpu_custom_call.1} parent=19 // pred_check
          %p163 = pneg %p83
        $region26: #{tpu_custom_call.1} parent=19 // pred_check_branch
          %165 = sbr.rel (%p163) target = $region28
        $region27: #{tpu_custom_call.1} parent=19 // pred_region
          %s166 = sand.u32 %s16, 1
          %s167 = scalar_lea.sflag [#allocation6], %s166
          %s168 = sand.u32 %s73, 1
          %s169 = smul.addr %s168, 8
          %s170 = scalar_lea.vmem [#allocation7], %s169
          %s172 = ssub.s32 128, 128
          %173 = vsyncadd %s167, %s172
          %s174 = smul.addr %s16, 128
          %s175 = scalar_lea.hbm %s2, %s174
          %s177 = sshll.u32 %s170, 4
          %s178 = int_to_ptr.vmem [resolvable:$true] %s177
          %180 = dma.hbm_to_vmem [thread:$0]  %s175, 128, %s178, %s167
        $region28: #{tpu_custom_call.1} parent=19 // pred_fallthru
          _
      $region20: #{tpu_custom_call.1} parent=5 // pred_fallthru
        _
      %p181 = scmp.le.s32.totalorder 1, %s16
      %p182 = scmp.lt.s32.totalorder %s16, 3
      %p183 = pnand %p181, %p182
      %p184 = pneg %p183
      // Predicated region
      $region29: #{tpu_custom_call.1} parent=5 // pred_check
        _
      $region30: #{tpu_custom_call.1} parent=5 // pred_check_branch
        %186 = sbr.rel (%p183) target = $region32
      $region31: #{tpu_custom_call.1} parent=5 // pred_region
        %s187 = ssub.s32 %s16, 1
        // Predicated region
        $region33: #{tpu_custom_call.1} parent=31 // pred_check
          %p188 = pneg %p37
        $region34: #{tpu_custom_call.1} parent=31 // pred_check_branch
          %190 = sbr.rel (%p188) target = $region36
        $region35: #{tpu_custom_call.1} parent=31 // pred_region
          %191 = dma.done [#allocation3], 128
        $region36: #{tpu_custom_call.1} parent=31 // pred_fallthru
          _
        %s192 = sand.u32 %s21, 1
        %s193 = scalar_lea.sflag [#allocation6], %s192
        %s194 = sand.u32 %s50, 1
        %s195 = smul.addr %s194, 8
        %s196 = scalar_lea.vmem [#allocation5], %s195
        // Predicated region
        $region37: #{tpu_custom_call.1} parent=31 // pred_check
          %p197 = pneg %p63
        $region38: #{tpu_custom_call.1} parent=31 // pred_check_branch
          %199 = sbr.rel (%p197) target = $region40
        $region39: #{tpu_custom_call.1} parent=31 // pred_region
          %200 = dma.done %s193, 128
        $region40: #{tpu_custom_call.1} parent=31 // pred_fallthru
          _
        %s201 = sand.u32 %s21, 1
        %s202 = scalar_lea.sflag [#allocation6], %s201
        %s203 = sand.u32 %s76, 1
        %s204 = smul.addr %s203, 8
        %s205 = scalar_lea.vmem [#allocation7], %s204
        // Predicated region
        $region41: #{tpu_custom_call.1} parent=31 // pred_check
          %p206 = pneg %p89
        $region42: #{tpu_custom_call.1} parent=31 // pred_check_branch
          %208 = sbr.rel (%p206) target = $region44
        $region43: #{tpu_custom_call.1} parent=31 // pred_region
          %209 = dma.done %s202, 128
        $region44: #{tpu_custom_call.1} parent=31 // pred_fallthru
          _
        %p210 = pneg %p37
        %p211 = pneg %p34
        %s212 = sand.u32 %s21, 1
        %s213 = scalar_lea.sflag [#allocation6], %s212
        %s214 = sand.u32 %s50, 1
        %s215 = smul.addr %s214, 8
        %s216 = scalar_lea.vmem [#allocation5], %s215
        %p217 = pneg %p63
        %p218 = pneg %p60
        %s219 = sand.u32 %s21, 1
        %s220 = scalar_lea.sflag [#allocation6], %s219
        %s221 = sand.u32 %s76, 1
        %s222 = smul.addr %s221, 8
        %s223 = scalar_lea.vmem [#allocation7], %s222
        %p224 = pneg %p89
        %p225 = pneg %p86
        %p226 = pneg %p115
        %p227 = pneg %p112
        %s228 = sand.u32 %s102, 1
        %s229 = scalar_lea.sflag [#allocation4], %s228
        %s230 = sand.u32 %s102, 1
        %s231 = smul.addr %s230, 8
        %s232 = scalar_lea.vmem [#allocation8], %s231
        %v233 = vld [vmem:[#allocation2] sm:$0xff]
        %v234 = vld [vmem:[%s196] sm:$0xff]
        %v235 = vld [vmem:[%s205] sm:$0xff]
        %v236 = vsub.f32 %v234, %v235
        %vm237 = vcmask 64512
        %v239 = vsel %vm237, %v233, 0
        %241 = vmatprep.subr.mxu0 0.0
        %242 = vmatpush1.msra.mxu0 %v236
        %243 = vmatprep.subr.mxu0 0.0
        %244 = vmatpush1.msra.mxu0 0.0
        %245 = vmatprep.subr.mxu0 0.0
        %246 = vmatpush1.msra.mxu0 0.0
        %247 = vmatprep.subr.mxu0 0.0
        %248 = vmatpush1.msra.mxu0 0.0
        %249 = vmatprep.subr.mxu0 0.0
        %250 = vmatpush1.msra.mxu0 0.0
        %251 = vmatprep.subr.mxu0 0.0
        %252 = vmatpush1.msra.mxu0 0.0
        %253 = vmatprep.subr.mxu0 0.0
        %254 = vmatpush1.msra.mxu0 0.0
        %255 = vmatprep.subr.mxu0 0.0
        %256 = vmatpush1.msra.mxu0 0.0
        %257 = vmatprep.subr.mxu0 0.0
        %258 = vmatpush1.msra.mxu0 0.0
        %259 = vmatprep.subr.mxu0 0.0
        %260 = vmatpush1.msra.mxu0 0.0
        %261 = vmatprep.subr.mxu0 0.0
        %262 = vmatpush1.msra.mxu0 0.0
        %263 = vmatprep.subr.mxu0 0.0
        %264 = vmatpush1.msra.mxu0 0.0
        %265 = vmatprep.subr.mxu0 0.0
        %266 = vmatpush1.msra.mxu0 0.0
        %267 = vmatprep.subr.mxu0 0.0
        %268 = vmatpush1.msra.mxu0 0.0
        %269 = vmatprep.subr.mxu0 0.0
        %270 = vmatpush1.msra.mxu0 0.0
        %271 = vmatprep.subr.mxu0 0.0
        %272 = vmatpush1.msra.mxu0 0.0
        %273 = vmatprep.subr.mxu0 0.0
        %274 = vmatpush1.msra.mxu0 0.0
        %275 = vmatprep.subr.mxu0 0.0
        %276 = vmatpush1.msra.mxu0 0.0
        %277 = vmatprep.subr.mxu0 0.0
        %278 = vmatpush1.msra.mxu0 0.0
        %279 = vmatprep.subr.mxu0 0.0
        %280 = vmatpush1.msra.mxu0 0.0
        %281 = vmatprep.subr.mxu0 0.0
        %282 = vmatpush1.msra.mxu0 0.0
        %283 = vmatprep.subr.mxu0 0.0
        %284 = vmatpush1.msra.mxu0 0.0
        %285 = vmatprep.subr.mxu0 0.0
        %286 = vmatpush1.msra.mxu0 0.0
        %287 = vmatprep.subr.mxu0 0.0
        %288 = vmatpush1.msra.mxu0 0.0
        %289 = vmatprep.subr.mxu0 0.0
        %290 = vmatpush1.msra.mxu0 0.0
        %291 = vmatprep.subr.mxu0 0.0
        %292 = vmatpush1.msra.mxu0 0.0
        %293 = vmatprep.subr.mxu0 0.0
        %294 = vmatpush1.msra.mxu0 0.0
        %295 = vmatprep.subr.mxu0 0.0
        %296 = vmatpush1.msra.mxu0 0.0
        %297 = vmatprep.subr.mxu0 0.0
        %298 = vmatpush1.msra.mxu0 0.0
        %299 = vmatprep.subr.mxu0 0.0
        %300 = vmatpush1.msra.mxu0 0.0
        %301 = vmatprep.subr.mxu0 0.0
        %302 = vmatpush1.msra.mxu0 0.0
        %303 = vmatprep.subr.mxu0 0.0
        %304 = vmatpush1.msra.mxu0 0.0
        %305 = vmatprep.mubr.f32.mxu0 0.0
        %306 = vmatmul.mubr.f32.gmra.mrb[0].mxu0 %v239
        %v307 = vpop.f32.mrb[0].mxu0
        %v308 = vadd.f32 0.0, %v307
        %v309 = vpop.f32.mrb[0].mxu0
        %310 = vdwg.mxu0
        %v311 = vand.u32 2147483647, %v308
        %vm312 = vcmask 261120
        %v313 = vsel %vm312, %v311, 0.0
        %v314 = vrot.slane %v313, 4
        %v315 = vadd.f32 %v313, %v314
        %v316 = vrot.slane %v315, 2
        %v317 = vadd.f32 %v315, %v316
        %v318 = vrot.slane %v317, 1
        %v319 = vadd.f32 %v317, %v318
        %v320 = vadd.f32 %v319, 0.0
        %vm321 = vcmask 253952
        %v322 = vsel %vm321, %v320, 0.0
        %323 = vadd.xlane.f32.xlu0 %v322
        %v324 = vpop.xlane.xlu0 %323
        %v325 = vrot.slane %v324, 4
        %v326 = vadd.f32 %v324, %v325
        %v327 = vrot.slane %v326, 2
        %v328 = vadd.f32 %v326, %v327
        %v329 = vrot.slane %v328, 1
        %v330 = vadd.f32 %v328, %v329
        %s331 = vtos %v330
        %v332 = vstv %s331
        %333 = vst [vmem:[%s232] sm:$0xff] %v332
        %s334 = sand.u32 %s102, 1
        %s335 = scalar_lea.sflag [#allocation4], %s334
        %s336 = sand.u32 %s102, 1
        %s337 = smul.addr %s336, 8
        %s338 = scalar_lea.vmem [#allocation8], %s337
        // Predicated region
        $region45: #{tpu_custom_call.1} parent=31 // pred_check
          %p339 = pneg %p112
        $region46: #{tpu_custom_call.1} parent=31 // pred_check_branch
          %341 = sbr.rel (%p339) target = $region48
        $region47: #{tpu_custom_call.1} parent=31 // pred_region
          %s343 = ssub.s32 128, 128
          %344 = vsyncadd %s335, %s343
          %s345 = smul.addr %s21, 128
          %s346 = scalar_lea.hbm %s3, %s345
          %s348 = sshll.u32 %s338, 4
          %s349 = int_to_ptr.vmem [resolvable:$true] %s348
          %351 = dma.vmem_to_hbm [thread:$0]  %s349, 128, %s346, %s335
        $region48: #{tpu_custom_call.1} parent=31 // pred_fallthru
          _
      $region32: #{tpu_custom_call.1} parent=5 // pred_fallthru
        _
      %p352 = scmp.le.s32.totalorder 2, %s16
      // Predicated region
      $region49: #{tpu_custom_call.1} parent=5 // pred_check
        %p353 = pneg %p352
      $region50: #{tpu_custom_call.1} parent=5 // pred_check_branch
        %355 = sbr.rel (%p353) target = $region52
      $region51: #{tpu_custom_call.1} parent=5 // pred_region
        %s356 = ssub.s32 %s16, 2
        // Predicated region
        $region53: #{tpu_custom_call.1} parent=51 // pred_check
          %p357 = pneg %p118
        $region54: #{tpu_custom_call.1} parent=51 // pred_check_branch
          %359 = sbr.rel (%p357) target = $region56
        $region55: #{tpu_custom_call.1} parent=51 // pred_region
          %s360 = sand.u32 %s103, 1
          %s361 = scalar_lea.sflag [#allocation4], %s360
          %s362 = sand.u32 %s103, 1
          %s363 = smul.addr %s362, 8
          %s364 = scalar_lea.vmem [#allocation8], %s363
          %365 = dma.done %s361, 128
        $region56: #{tpu_custom_call.1} parent=51 // pred_fallthru
          _
      $region52: #{tpu_custom_call.1} parent=5 // pred_fallthru
        _
    $region6: #{tpu_custom_call.1} parent=1 // loop_footer
      %s20 = sadd.s32 1, %s16
    $region7: #{tpu_custom_call.1} parent=1 // loop_footer_branch
      %15 = sbr.rel target = $region3
    $region8: #{tpu_custom_call.1} parent=1 // loop_exit
      _
    %366 = vsyncpa [#allocation3], 1
    %s367 = scalar_lea.sflag [#allocation3], 1
    %368 = vsyncpa %s367, 1
    %369 = vsyncpa [#allocation6], 1
    %s370 = scalar_lea.sflag [#allocation6], 1
    %371 = vsyncpa %s370, 1
    %372 = vsyncpa [#allocation4], 1
    %s373 = scalar_lea.sflag [#allocation4], 1
    %374 = vsyncpa %s373, 1

</llo_original>
